<compile_context>
chip_gen: v7x
topology: tpu7x:2x2x1
jax: 0.10.0
libtpu: 0.0.40
codegen_flags: <defaults>
</compile_context>

<pallas_src>
import jax
import jax.numpy as jnp
from jax.experimental import pallas as pl
from jax.experimental.pallas import tpu as pltpu


GENRES = ['bc', 'bn', 'mz', 'nw', 'pt', 'tc', 'wb']
G_TO_I = {g: i + 1 for i, g in enumerate(GENRES)}
GENRE_DIM = 20
VOCAB = len(GENRES) + 1          # 8 (index 0 = padding / unknown)

# ~640 KB of output per grid step: per-step pipeline overhead (~0.35 us) is a
# small fraction of the HBM write time, while the lane-padded VMEM buffers
# (see vmem budget below) stay well under v7x's 32 MiB scoped-VMEM default.
_TARGET_TILE_N = 8192
# Below this a fused XLA gather (jnp.take) is strictly faster than a custom
# call launch + index pad for an 8x20 table.
_KERNEL_MIN_N = 16384


def _round_up(x, m):
    return ((x + m - 1) // m) * m


def genre_embed_kernel(idx_ref, table_ref, out_ref):
    # idx_ref:   (TILE_N, 1) int32   — genre indices for this tile
    # table_ref: (V, D)      float32 — embedding table (constant block, resident)
    # out_ref:   (TILE_N, D)         — output tile, written in final (N, D) layout
    tile_n = idx_ref.shape[0]
    v = table_ref.shape[0]
    idx = idx_ref[...]                                            # (TILE_N, 1)
    iota_v = jax.lax.broadcasted_iota(jnp.int32, (tile_n, v), 1)  # (TILE_N, V)
    one_hot = (iota_v == idx).astype(jnp.float32)                 # (TILE_N, V)
    # K=8, N=20 matmul on the MXU; on v5e an 8-way jnp.where select chain on
    # the VPU is an alternative if the padded MXU passes ever pace the kernel.
    acc = jnp.dot(one_hot, table_ref[...],
                  preferred_element_type=jnp.float32)             # (TILE_N, D)
    out_ref[...] = acc.astype(out_ref.dtype)


def _choose_tile_n(n, target=_TARGET_TILE_N):
    """Lane-dense (multiple-of-128) row tile; keep >= 2 grid steps when possible."""
    n128 = _round_up(max(int(n), 1), 128)
    if n128 <= 128:
        return 128
    if n128 <= 2 * target:
        # Split modest N into (at least) two steps so ("parallel",) can shard
        # both TensorCores on v7x; harmless on single-TC v5e/v6e.
        return max(128, _round_up((n128 + 1) // 2, 128))
    return target


def _genre_embedding_pallas(indices, table, *, tile_n_target=_TARGET_TILE_N,
                            out_dtype=jnp.float32):
    """Tiled Pallas gather. indices: (N,) int -> (N, D) in out_dtype."""
    n = int(indices.shape[0])
    v, d = table.shape
    tile_n = _choose_tile_n(n, tile_n_target)
    n_pad = _round_up(n, tile_n)
    grid = (n_pad // tile_n,)

    # Pad ragged tail with index 0 (padding row -> zeros; sliced off below).
    idx_padded = jnp.zeros((n_pad, 1), dtype=jnp.int32)
    idx_padded = idx_padded.at[:n, 0].set(indices.astype(jnp.int32))
    table_f32 = table.astype(jnp.float32)

    # VMEM budget: idx and out blocks pad their minor dim to 128 lanes
    # (tile_n * 512 B each), double-buffered, plus matmul/one-hot temporaries.
    bytes_per_padded_tile = tile_n * 128 * 4
    vmem_limit = max(32 << 20, 7 * bytes_per_padded_tile + (2 << 20))

    out_bytes = jnp.dtype(out_dtype).itemsize
    out = pl.pallas_call(
        genre_embed_kernel,
        out_shape=jax.ShapeDtypeStruct((n_pad, d), out_dtype),
        grid_spec=pl.GridSpec(
            grid=grid,
            in_specs=[
                pl.BlockSpec((tile_n, 1), lambda i: (i, 0)),   # indices tile
                pl.BlockSpec((v, d), lambda i: (0, 0)),        # table (resident)
            ],
            out_specs=pl.BlockSpec((tile_n, d), lambda i: (i, 0)),
        ),
        compiler_params=pltpu.CompilerParams(
            dimension_semantics=("parallel",),
            vmem_limit_bytes=int(vmem_limit),
        ),
        cost_estimate=pl.CostEstimate(
            flops=2 * n_pad * v * d,
            transcendentals=0,
            bytes_accessed=n_pad * 4 + v * d * 4 + n_pad * d * out_bytes,
        ),
    )(idx_padded, table_f32)

    return out[:n]                                               # (N, D), final layout


def genre_embedding(indices, table, *, force_kernel=False,
                    tile_n_target=_TARGET_TILE_N, out_dtype=jnp.float32):
    """Embedding lookup matching nn.Embedding(8, D, padding_idx=0).

    For small N (the realistic Genre.forward case) a fused XLA gather is
    already HBM-roofline-bound and avoids the custom-call launch, so we only
    take the Pallas path for large N (or force_kernel=True for testing).
    """
    n = int(indices.shape[0])
    if not force_kernel and n < _KERNEL_MIN_N:
        return jnp.take(table, indices.astype(jnp.int32), axis=0).astype(out_dtype)
    return _genre_embedding_pallas(indices, table,
                                   tile_n_target=tile_n_target, out_dtype=out_dtype)


def g_to_i_lookup(labels):
    """Host-side string -> index mapping (no tensor ops), as in the module."""
    return jnp.array([G_TO_I.get(g, 0) for g in labels], dtype=jnp.int32)


def genre_forward(labels, table):
    """Full Genre.forward equivalent: strings -> indices -> embeddings (N, D)."""
    return genre_embedding(g_to_i_lookup(labels), table)


def make_embedding_table(key, genre_dim=GENRE_DIM):
    # Mimic nn.Embedding N(0,1) init with the padding row zeroed.
    table = jax.random.normal(key, (VOCAB, genre_dim), dtype=jnp.float32)
    table = table.at[0].set(0.0)  # padding_idx=0
    return table


if __name__ == "__main__":
    key = jax.random.PRNGKey(0)
    k_tab, k_idx = jax.random.split(key)
    table = make_embedding_table(k_tab)

    # 1) Small batch exactly like the module would see -> fast jnp.take path.
    labels = ['bc', 'nw', 'tc', 'xx', 'wb', 'pt', 'mz', 'bn']   # 'xx' -> index 0
    out_small = genre_forward(labels, table)                    # (8, 20)
    ref_small = jnp.take(table, g_to_i_lookup(labels), axis=0)
    assert out_small.shape == (len(labels), GENRE_DIM)
    assert jnp.allclose(out_small, ref_small, atol=1e-6), "small-path mismatch"

    # 2) Exercise the Pallas kernel path: ragged N -> padded, 2-step grid
    #    (tile clamp keeps grid >= 2), verified against the gather.
    n = 300
    idx_big = jax.random.randint(k_idx, (n,), 0, VOCAB, dtype=jnp.int32)
    out_big = genre_embedding(idx_big, table, force_kernel=True)
    out_big = jax.block_until_ready(out_big)
    ref_big = jnp.take(table, idx_big, axis=0)
    assert out_big.shape == (n, GENRE_DIM)
    assert jnp.allclose(out_big, ref_big, atol=1e-6), "kernel path mismatch"

    # 3) Exact tile multiple (no padding) through the kernel path.
    n2 = 256
    idx2 = jax.random.randint(jax.random.PRNGKey(1), (n2,), 0, VOCAB, dtype=jnp.int32)
    out2 = jax.block_until_ready(genre_embedding(idx2, table, force_kernel=True))
    assert jnp.allclose(out2, jnp.take(table, idx2, axis=0), atol=1e-6)

    print("KERNEL_OK")
</pallas_src>

<mosaic_0001>
module attributes {stable_mosaic.version = 11 : i64} {
  func.func @genre_embed_kernel(%arg0: i32, %arg1: memref<256x1xi32, #tpu.memory_space<vmem>>, %arg2: memref<8x20xf32, #tpu.memory_space<vmem>>, %arg3: memref<256x20xf32, #tpu.memory_space<vmem>>) attributes {dimension_semantics = [#tpu.dimension_semantics<parallel>], iteration_bounds = array<i64: 2>, scalar_prefetch = 0 : i64, scratch_operands = 0 : i64, tpu.core_type = #tpu.core_type<tc>, window_params = [{transform_indices = @transform_0, window_bounds = array<i64: 256, 1>}, {pipeline_mode = #tpu.pipeline_mode<synchronous>, transform_indices = @transform_1, window_bounds = array<i64: 8, 20>}, {transform_indices = @transform_2, window_bounds = array<i64: 256, 20>}]} {
    %c0 = arith.constant 0 : index
    %c0_0 = arith.constant 0 : index
    %0 = vector.load %arg1[%c0, %c0_0] : memref<256x1xi32, #tpu.memory_space<vmem>>, vector<256x1xi32>
    %1 = tpu.iota {dimensions = array<i32: 1>} : vector<256x8xi32>
    %2 = vector.broadcast %0 : vector<256x1xi32> to vector<256x8xi32>
    %3 = arith.cmpi eq, %1, %2 : vector<256x8xi32>
    %4 = arith.extui %3 : vector<256x8xi1> to vector<256x8xi32>
    %5 = arith.sitofp %4 : vector<256x8xi32> to vector<256x8xf32>
    %c0_1 = arith.constant 0 : index
    %c0_2 = arith.constant 0 : index
    %6 = vector.load %arg2[%c0_1, %c0_2] : memref<8x20xf32, #tpu.memory_space<vmem>>, vector<8x20xf32>
    %cst = arith.constant dense<0.000000e+00> : vector<256x20xf32>
    %7 = tpu.matmul %5, %6, %cst {dimension_numbers = #tpu.dot_dimension_numbers<[1], [0], [0], [1], [0, 0, 1, 1], [], []>} : vector<256x8xf32>, vector<8x20xf32>, vector<256x20xf32> -> vector<256x20xf32>
    %c0_3 = arith.constant 0 : index
    %c0_4 = arith.constant 0 : index
    %8 = vector.load %arg3[%c0_3, %c0_4] : memref<256x20xf32, #tpu.memory_space<vmem>>, vector<256x20xf32>
    tpu.vector_store %arg3[%c0_3, %c0_4], %7 {strides = array<i32>} : memref<256x20xf32, #tpu.memory_space<vmem>>, vector<256x20xf32>,
    return
  }
  func.func @transform_0(%arg0: i32) -> (i32, i32) {
    %c0_i32 = arith.constant 0 : i32
    %c0_i32_0 = arith.constant 0 : i32
    return %arg0, %c0_i32 : i32, i32
  }
  func.func @transform_1(%arg0: i32) -> (i32, i32) {
    %c0_i32 = arith.constant 0 : i32
    %c0_i32_0 = arith.constant 0 : i32
    %c0_i32_1 = arith.constant 0 : i32
    return %c0_i32, %c0_i32_0 : i32, i32
  }
  func.func @transform_2(%arg0: i32) -> (i32, i32) {
    %c0_i32 = arith.constant 0 : i32
    %c0_i32_0 = arith.constant 0 : i32
    return %arg0, %c0_i32 : i32, i32
  }
}

</mosaic_0001>

<llo_original>
// kernel: tpu_custom_call.1
$region0: #{tpu_custom_call.1}
  #allocation0 [shape = 'u32[]', space=smem, size = 0x4, offset = 0x4, fixed_abs, tag = 'smem constant byte address 0x4 - core index']
  #allocation1 [shape = 'u32[144,128]{1,0:T(1,128)}', space=vmem, size = 0x12000, scoped, tag = 'internal scratch']
  %s0 = inlined_call_operand.vmem [shape: s32[512,1], index: 0, kind: input, shape index: {}]
  %s1 = inlined_call_operand.vmem [shape: f32[8,20], index: 1, kind: input, shape index: {}]
  %s2 = inlined_call_operand.vmem [shape: f32[512,20], index: 2, kind: output, shape index: {}]
  %s3 = sld [smem:[#allocation0]]
  $region41: #{tpu_custom_call.1} parent=0
    _
  %s5 = ssub.s32 1, %s3
  %s6 = scalar_select 0, %s5, %s3
  loop: start=0, step=1, limit=4
  $region2: #{tpu_custom_call.1} parent=0 // loop_pre_header
    _
  $region3: #{tpu_custom_call.1} parent=0 // loop_header
    %s8 = sphi 0, %s12
    %p9 = scmp.ge.s32.totalorder %s8, 4
    %s18 = sphi 0, %s20
    %s21 = sphi 0, %s18
    %s22 = sphi 0, %s21
    %s38 = sphi 0, %s22
    %s42 = sphi 0, %s42
    %s44 = sphi 0, %s42
    %s45 = sphi 0, %s44
    %s59 = sphi 0, %s45
    %s65 = sphi 0, %s67
    %s68 = sphi 0, %s65
    %s69 = sphi 0, %s68
    %s85 = sphi 0, %s69
  $region4: #{tpu_custom_call.1} parent=0 // loop_header_branch
    %11 = sbr.rel (%p9) target = $region8
  $region5: #{tpu_custom_call.1} parent=0 // loop_body
    %s13 = ssub.s32 %s8, 1
    %s14 = ssub.s32 %s8, 2
    %s15 = sadd.s32 %s8, 1
    %s16 = ssub.s32 %s8, %s15
    %p17 = scmp.eq.s32.totalorder %s16, 0
    %s19 = sadd.s32 %s18, 1
    %s20 = scalar_select %p17, %s18, %s19
    %p23 = pneg %p17
    %p24 = scmp.eq.s32.totalorder %s8, 1
    %p25 = por %p23, %p24
    %p26 = scmp.ne.s32.totalorder %s18, %s21
    %p27 = scmp.eq.s32.totalorder %s8, 0
    %p28 = por %p26, %p27
    %p29 = scmp.ne.s32.totalorder %s18, %s21
    %p30 = scmp.eq.s32.totalorder %s13, 1
    %p31 = por %p29, %p30
    %p32 = scmp.ne.s32.totalorder %s21, %s22
    %p33 = scmp.eq.s32.totalorder %s13, 0
    %p34 = por %p32, %p33
    %p35 = scmp.ne.s32.totalorder %s21, %s22
    %p36 = scmp.eq.s32.totalorder %s14, 1
    %p37 = por %p35, %p36
    %p39 = scmp.ne.s32.totalorder %s22, %s38
    %p40 = scmp.eq.s32.totalorder %s14, 0
    %p41 = por %p39, %p40
    %s43 = sadd.s32 %s42, 1
    %p46 = scmp.eq.s32.totalorder %s8, 1
    %p47 = scmp.ne.s32.totalorder %s42, %s44
    %p48 = scmp.eq.s32.totalorder %s8, 0
    %p49 = por %p47, %p48
    %p50 = scmp.ne.s32.totalorder %s42, %s44
    %p51 = scmp.eq.s32.totalorder %s13, 1
    %p52 = por %p50, %p51
    %p53 = scmp.ne.s32.totalorder %s44, %s45
    %p54 = scmp.eq.s32.totalorder %s13, 0
    %p55 = por %p53, %p54
    %p56 = scmp.ne.s32.totalorder %s44, %s45
    %p57 = scmp.eq.s32.totalorder %s14, 1
    %p58 = por %p56, %p57
    %p60 = scmp.ne.s32.totalorder %s45, %s59
    %p61 = scmp.eq.s32.totalorder %s14, 0
    %p62 = por %p60, %p61
    %s63 = ssub.s32 %s8, %s15
    %p64 = scmp.eq.s32.totalorder %s63, 0
    %s66 = sadd.s32 %s65, 1
    %s67 = scalar_select %p64, %s65, %s66
    %p70 = pneg %p64
    %p71 = scmp.eq.s32.totalorder %s8, 1
    %p72 = por %p70, %p71
    %p73 = scmp.ne.s32.totalorder %s65, %s68
    %p74 = scmp.eq.s32.totalorder %s8, 0
    %p75 = por %p73, %p74
    %p76 = scmp.ne.s32.totalorder %s65, %s68
    %p77 = scmp.eq.s32.totalorder %s13, 1
    %p78 = por %p76, %p77
    %p79 = scmp.ne.s32.totalorder %s68, %s69
    %p80 = scmp.eq.s32.totalorder %s13, 0
    %p81 = por %p79, %p80
    %p82 = scmp.ne.s32.totalorder %s68, %s69
    %p83 = scmp.eq.s32.totalorder %s14, 1
    %p84 = por %p82, %p83
    %p86 = scmp.ne.s32.totalorder %s69, %s85
    %p87 = scmp.eq.s32.totalorder %s14, 0
    %p88 = por %p86, %p87
    %p89 = scmp.le.s32.totalorder 1, %s8
    %p90 = scmp.lt.s32.totalorder %s8, 3
    %p91 = pnand %p89, %p90
    %p92 = pneg %p91
    // Predicated region
    $region9: #{tpu_custom_call.1} parent=5 // pred_check
      _
    $region10: #{tpu_custom_call.1} parent=5 // pred_check_branch
      %94 = sbr.rel (%p91) target = $region12
    $region11: #{tpu_custom_call.1} parent=5 // pred_region
      %s95 = ssub.s32 %s8, 1
      // Predicated region
      $region13: #{tpu_custom_call.1} parent=11 // pred_check
        %p96 = pneg %p55
      $region14: #{tpu_custom_call.1} parent=11 // pred_check_branch
        %98 = sbr.rel (%p96) target = $region16
      $region15: #{tpu_custom_call.1} parent=11 // pred_region
        _
      $region16: #{tpu_custom_call.1} parent=11 // pred_fallthru
        _
    $region12: #{tpu_custom_call.1} parent=5 // pred_fallthru
      _
    %p99 = scmp.lt.s32.totalorder %s8, 2
    // Predicated region
    $region17: #{tpu_custom_call.1} parent=5 // pred_check
      %p100 = pneg %p99
    $region18: #{tpu_custom_call.1} parent=5 // pred_check_branch
      %102 = sbr.rel (%p100) target = $region20
    $region19: #{tpu_custom_call.1} parent=5 // pred_region
      // Predicated region
      $region21: #{tpu_custom_call.1} parent=19 // pred_check
        %p103 = pneg %p28
      $region22: #{tpu_custom_call.1} parent=19 // pred_check_branch
        %105 = sbr.rel (%p103) target = $region24
      $region23: #{tpu_custom_call.1} parent=19 // pred_region
        %s106 = smul.u32 32, %s8
        %p107 = scmp.lt.s32.totalorder %s106, 63
        %s108 = scalar_select %p107, %s106, 63
        %s109 = smul.addr %s108, 8
        %s110 = scalar_lea.vmem %s0, %s109
        %s111 = smul.u32 32, %s8
      $region24: #{tpu_custom_call.1} parent=19 // pred_fallthru
        _
    $region20: #{tpu_custom_call.1} parent=5 // pred_fallthru
      _
    %p112 = scmp.le.s32.totalorder 1, %s8
    %p113 = scmp.lt.s32.totalorder %s8, 3
    %p114 = pnand %p112, %p113
    %p115 = pneg %p114
    // Predicated region
    $region25: #{tpu_custom_call.1} parent=5 // pred_check
      _
    $region26: #{tpu_custom_call.1} parent=5 // pred_check_branch
      %117 = sbr.rel (%p114) target = $region28
    $region27: #{tpu_custom_call.1} parent=5 // pred_region
      %s118 = ssub.s32 %s8, 1
      %s119 = smul.u32 32, %s13
      %p120 = scmp.lt.s32.totalorder %s119, 63
      %s121 = scalar_select %p120, %s119, 63
      %s122 = smul.addr %s121, 8
      %s123 = scalar_lea.vmem %s0, %s122
      %p124 = pneg %p34
      %p125 = pneg %p31
      %p126 = pneg %p55
      %p127 = pneg %p52
      %p128 = pneg %p81
      %p129 = pneg %p78
      %s130 = smul.u32 32, %s13
      %p131 = scmp.lt.s32.totalorder %s130, 63
      %s132 = scalar_select %p131, %s130, 63
      %s133 = smul.addr %s132, 8
      %s134 = scalar_lea.vmem %s2, %s133
      %s135 = smul.u32 32, %s13
      %p136 = scmp.lt.s32.totalorder %s135, 63
      %s137 = scalar_select %p136, %s135, 63
      %s138 = smul.addr %s137, 8
      %s139 = scalar_lea.vmem %s0, %s138
      %s140 = smul.u32 32, %s13
      %s141 = smul.u32 32, %s13
      %p142 = scmp.lt.s32.totalorder %s141, 63
      %s143 = scalar_select %p142, %s141, 63
      %s144 = smul.addr %s143, 8
      %s145 = scalar_lea.vmem %s2, %s144
      %s146 = smul.u32 32, %s13
      %v147 = vld [vmem:[%s139] sm:$0xff]
      %v148 = vld [vmem:[%s139 + $0x8] sm:$0xff]
      %v149 = vld [vmem:[%s139 + $0x10] sm:$0xff]
      %v150 = vld [vmem:[%s139 + $0x18] sm:$0xff]
      %v151 = vld [vmem:[%s139 + $0x20] sm:$0xff]
      %v152 = vld [vmem:[%s139 + $0x28] sm:$0xff]
      %v153 = vld [vmem:[%s139 + $0x30] sm:$0xff]
      %v154 = vld [vmem:[%s139 + $0x38] sm:$0xff]
      %v155 = vld [vmem:[%s139 + $0x40] sm:$0xff]
      %v156 = vld [vmem:[%s139 + $0x48] sm:$0xff]
      %v157 = vld [vmem:[%s139 + $0x50] sm:$0xff]
      %v158 = vld [vmem:[%s139 + $0x58] sm:$0xff]
      %v159 = vld [vmem:[%s139 + $0x60] sm:$0xff]
      %v160 = vld [vmem:[%s139 + $0x68] sm:$0xff]
      %v161 = vld [vmem:[%s139 + $0x70] sm:$0xff]
      %v162 = vld [vmem:[%s139 + $0x78] sm:$0xff]
      %v163 = vld [vmem:[%s139 + $0x80] sm:$0xff]
      %v164 = vld [vmem:[%s139 + $0x88] sm:$0xff]
      %v165 = vld [vmem:[%s139 + $0x90] sm:$0xff]
      %v166 = vld [vmem:[%s139 + $0x98] sm:$0xff]
      %v167 = vld [vmem:[%s139 + $0xa0] sm:$0xff]
      %v168 = vld [vmem:[%s139 + $0xa8] sm:$0xff]
      %v169 = vld [vmem:[%s139 + $0xb0] sm:$0xff]
      %v170 = vld [vmem:[%s139 + $0xb8] sm:$0xff]
      %v171 = vld [vmem:[%s139 + $0xc0] sm:$0xff]
      %v172 = vld [vmem:[%s139 + $0xc8] sm:$0xff]
      %v173 = vld [vmem:[%s139 + $0xd0] sm:$0xff]
      %v174 = vld [vmem:[%s139 + $0xd8] sm:$0xff]
      %v175 = vld [vmem:[%s139 + $0xe0] sm:$0xff]
      %v176 = vld [vmem:[%s139 + $0xe8] sm:$0xff]
      %v177 = vld [vmem:[%s139 + $0xf0] sm:$0xff]
      %v178 = vld [vmem:[%s139 + $0xf8] sm:$0xff]
      %v179 = vlaneseq
      %v180 = vand.u32 %v179, 127
      %181 = vset.pattern.permute.xlu0 0
      %182 = vperm.xlu0 %181, %v147
      %v183 = vpop.permute.xlu0 %182
      %184 = vset.pattern.permute.xlu0 0
      %185 = vperm.xlu0 %184, %v148
      %v186 = vpop.permute.xlu0 %185
      %187 = vset.pattern.permute.xlu0 0
      %188 = vperm.xlu0 %187, %v149
      %v189 = vpop.permute.xlu0 %188
      %190 = vset.pattern.permute.xlu0 0
      %191 = vperm.xlu0 %190, %v150
      %v192 = vpop.permute.xlu0 %191
      %193 = vset.pattern.permute.xlu0 0
      %194 = vperm.xlu0 %193, %v151
      %v195 = vpop.permute.xlu0 %194
      %196 = vset.pattern.permute.xlu0 0
      %197 = vperm.xlu0 %196, %v152
      %v198 = vpop.permute.xlu0 %197
      %199 = vset.pattern.permute.xlu0 0
      %200 = vperm.xlu0 %199, %v153
      %v201 = vpop.permute.xlu0 %200
      %202 = vset.pattern.permute.xlu0 0
      %203 = vperm.xlu0 %202, %v154
      %v204 = vpop.permute.xlu0 %203
      %205 = vset.pattern.permute.xlu0 0
      %206 = vperm.xlu0 %205, %v155
      %v207 = vpop.permute.xlu0 %206
      %208 = vset.pattern.permute.xlu0 0
      %209 = vperm.xlu0 %208, %v156
      %v210 = vpop.permute.xlu0 %209
      %211 = vset.pattern.permute.xlu0 0
      %212 = vperm.xlu0 %211, %v157
      %v213 = vpop.permute.xlu0 %212
      %214 = vset.pattern.permute.xlu0 0
      %215 = vperm.xlu0 %214, %v158
      %v216 = vpop.permute.xlu0 %215
      %217 = vset.pattern.permute.xlu0 0
      %218 = vperm.xlu0 %217, %v159
      %v219 = vpop.permute.xlu0 %218
      %220 = vset.pattern.permute.xlu0 0
      %221 = vperm.xlu0 %220, %v160
      %v222 = vpop.permute.xlu0 %221
      %223 = vset.pattern.permute.xlu0 0
      %224 = vperm.xlu0 %223, %v161
      %v225 = vpop.permute.xlu0 %224
      %226 = vset.pattern.permute.xlu0 0
      %227 = vperm.xlu0 %226, %v162
      %v228 = vpop.permute.xlu0 %227
      %229 = vset.pattern.permute.xlu0 0
      %230 = vperm.xlu0 %229, %v163
      %v231 = vpop.permute.xlu0 %230
      %232 = vset.pattern.permute.xlu0 0
      %233 = vperm.xlu0 %232, %v164
      %v234 = vpop.permute.xlu0 %233
      %235 = vset.pattern.permute.xlu0 0
      %236 = vperm.xlu0 %235, %v165
      %v237 = vpop.permute.xlu0 %236
      %238 = vset.pattern.permute.xlu0 0
      %239 = vperm.xlu0 %238, %v166
      %v240 = vpop.permute.xlu0 %239
      %241 = vset.pattern.permute.xlu0 0
      %242 = vperm.xlu0 %241, %v167
      %v243 = vpop.permute.xlu0 %242
      %244 = vset.pattern.permute.xlu0 0
      %245 = vperm.xlu0 %244, %v168
      %v246 = vpop.permute.xlu0 %245
      %247 = vset.pattern.permute.xlu0 0
      %248 = vperm.xlu0 %247, %v169
      %v249 = vpop.permute.xlu0 %248
      %250 = vset.pattern.permute.xlu0 0
      %251 = vperm.xlu0 %250, %v170
      %v252 = vpop.permute.xlu0 %251
      %253 = vset.pattern.permute.xlu0 0
      %254 = vperm.xlu0 %253, %v171
      %v255 = vpop.permute.xlu0 %254
      %256 = vset.pattern.permute.xlu0 0
      %257 = vperm.xlu0 %256, %v172
      %v258 = vpop.permute.xlu0 %257
      %259 = vset.pattern.permute.xlu0 0
      %260 = vperm.xlu0 %259, %v173
      %v261 = vpop.permute.xlu0 %260
      %262 = vset.pattern.permute.xlu0 0
      %263 = vperm.xlu0 %262, %v174
      %v264 = vpop.permute.xlu0 %263
      %265 = vset.pattern.permute.xlu0 0
      %266 = vperm.xlu0 %265, %v175
      %v267 = vpop.permute.xlu0 %266
      %268 = vset.pattern.permute.xlu0 0
      %269 = vperm.xlu0 %268, %v176
      %v270 = vpop.permute.xlu0 %269
      %271 = vset.pattern.permute.xlu0 0
      %272 = vperm.xlu0 %271, %v177
      %v273 = vpop.permute.xlu0 %272
      %274 = vset.pattern.permute.xlu0 0
      %275 = vperm.xlu0 %274, %v178
      %v276 = vpop.permute.xlu0 %275
      %vm277 = vcmp.eq.s32.totalorder %v180, %v183
      %vm278 = vcmp.eq.s32.totalorder %v180, %v186
      %vm279 = vcmp.eq.s32.totalorder %v180, %v189
      %vm280 = vcmp.eq.s32.totalorder %v180, %v192
      %vm281 = vcmp.eq.s32.totalorder %v180, %v195
      %vm282 = vcmp.eq.s32.totalorder %v180, %v198
      %vm283 = vcmp.eq.s32.totalorder %v180, %v201
      %vm284 = vcmp.eq.s32.totalorder %v180, %v204
      %vm285 = vcmp.eq.s32.totalorder %v180, %v207
      %vm286 = vcmp.eq.s32.totalorder %v180, %v210
      %vm287 = vcmp.eq.s32.totalorder %v180, %v213
      %vm288 = vcmp.eq.s32.totalorder %v180, %v216
      %vm289 = vcmp.eq.s32.totalorder %v180, %v219
      %vm290 = vcmp.eq.s32.totalorder %v180, %v222
      %vm291 = vcmp.eq.s32.totalorder %v180, %v225
      %vm292 = vcmp.eq.s32.totalorder %v180, %v228
      %vm293 = vcmp.eq.s32.totalorder %v180, %v231
      %vm294 = vcmp.eq.s32.totalorder %v180, %v234
      %vm295 = vcmp.eq.s32.totalorder %v180, %v237
      %vm296 = vcmp.eq.s32.totalorder %v180, %v240
      %vm297 = vcmp.eq.s32.totalorder %v180, %v243
      %vm298 = vcmp.eq.s32.totalorder %v180, %v246
      %vm299 = vcmp.eq.s32.totalorder %v180, %v249
      %vm300 = vcmp.eq.s32.totalorder %v180, %v252
      %vm301 = vcmp.eq.s32.totalorder %v180, %v255
      %vm302 = vcmp.eq.s32.totalorder %v180, %v258
      %vm303 = vcmp.eq.s32.totalorder %v180, %v261
      %vm304 = vcmp.eq.s32.totalorder %v180, %v264
      %vm305 = vcmp.eq.s32.totalorder %v180, %v267
      %vm306 = vcmp.eq.s32.totalorder %v180, %v270
      %vm307 = vcmp.eq.s32.totalorder %v180, %v273
      %vm308 = vcmp.eq.s32.totalorder %v180, %v276
      %v309 = vsel %vm277, 1, 0
      %v310 = vsel %vm278, 1, 0
      %v311 = vsel %vm279, 1, 0
      %v312 = vsel %vm280, 1, 0
      %v313 = vsel %vm281, 1, 0
      %v314 = vsel %vm282, 1, 0
      %v315 = vsel %vm283, 1, 0
      %v316 = vsel %vm284, 1, 0
      %v317 = vsel %vm285, 1, 0
      %v318 = vsel %vm286, 1, 0
      %v319 = vsel %vm287, 1, 0
      %v320 = vsel %vm288, 1, 0
      %v321 = vsel %vm289, 1, 0
      %v322 = vsel %vm290, 1, 0
      %v323 = vsel %vm291, 1, 0
      %v324 = vsel %vm292, 1, 0
      %v325 = vsel %vm293, 1, 0
      %v326 = vsel %vm294, 1, 0
      %v327 = vsel %vm295, 1, 0
      %v328 = vsel %vm296, 1, 0
      %v329 = vsel %vm297, 1, 0
      %v330 = vsel %vm298, 1, 0
      %v331 = vsel %vm299, 1, 0
      %v332 = vsel %vm300, 1, 0
      %v333 = vsel %vm301, 1, 0
      %v334 = vsel %vm302, 1, 0
      %v335 = vsel %vm303, 1, 0
      %v336 = vsel %vm304, 1, 0
      %v337 = vsel %vm305, 1, 0
      %v338 = vsel %vm306, 1, 0
      %v339 = vsel %vm307, 1, 0
      %v340 = vsel %vm308, 1, 0
      %v341 = vcvt.s32.f32 %v309
      %v342 = vcvt.s32.f32 %v310
      %v343 = vcvt.s32.f32 %v311
      %v344 = vcvt.s32.f32 %v312
      %v345 = vcvt.s32.f32 %v313
      %v346 = vcvt.s32.f32 %v314
      %v347 = vcvt.s32.f32 %v315
      %v348 = vcvt.s32.f32 %v316
      %v349 = vcvt.s32.f32 %v317
      %v350 = vcvt.s32.f32 %v318
      %v351 = vcvt.s32.f32 %v319
      %v352 = vcvt.s32.f32 %v320
      %v353 = vcvt.s32.f32 %v321
      %v354 = vcvt.s32.f32 %v322
      %v355 = vcvt.s32.f32 %v323
      %v356 = vcvt.s32.f32 %v324
      %v357 = vcvt.s32.f32 %v325
      %v358 = vcvt.s32.f32 %v326
      %v359 = vcvt.s32.f32 %v327
      %v360 = vcvt.s32.f32 %v328
      %v361 = vcvt.s32.f32 %v329
      %v362 = vcvt.s32.f32 %v330
      %v363 = vcvt.s32.f32 %v331
      %v364 = vcvt.s32.f32 %v332
      %v365 = vcvt.s32.f32 %v333
      %v366 = vcvt.s32.f32 %v334
      %v367 = vcvt.s32.f32 %v335
      %v368 = vcvt.s32.f32 %v336
      %v369 = vcvt.s32.f32 %v337
      %v370 = vcvt.s32.f32 %v338
      %v371 = vcvt.s32.f32 %v339
      %v372 = vcvt.s32.f32 %v340
      %v373 = vld [vmem:[%s1] sm:$0xff]
      %vm374 = vcmask 64512
      %v376 = vsel %vm374, %v341, 0
      %v379 = vsel %vm374, %v342, 0
      %v382 = vsel %vm374, %v343, 0
      %v385 = vsel %vm374, %v344, 0
      %v388 = vsel %vm374, %v345, 0
      %v391 = vsel %vm374, %v346, 0
      %v394 = vsel %vm374, %v347, 0
      %v397 = vsel %vm374, %v348, 0
      %v400 = vsel %vm374, %v349, 0
      %v403 = vsel %vm374, %v350, 0
      %v406 = vsel %vm374, %v351, 0
      %v409 = vsel %vm374, %v352, 0
      %v412 = vsel %vm374, %v353, 0
      %v415 = vsel %vm374, %v354, 0
      %v418 = vsel %vm374, %v355, 0
      %v421 = vsel %vm374, %v356, 0
      %v424 = vsel %vm374, %v357, 0
      %v427 = vsel %vm374, %v358, 0
      %v430 = vsel %vm374, %v359, 0
      %v433 = vsel %vm374, %v360, 0
      %v436 = vsel %vm374, %v361, 0
      %v439 = vsel %vm374, %v362, 0
      %v442 = vsel %vm374, %v363, 0
      %v445 = vsel %vm374, %v364, 0
      %v448 = vsel %vm374, %v365, 0
      %v451 = vsel %vm374, %v366, 0
      %v454 = vsel %vm374, %v367, 0
      %v457 = vsel %vm374, %v368, 0
      %v460 = vsel %vm374, %v369, 0
      %v463 = vsel %vm374, %v370, 0
      %v466 = vsel %vm374, %v371, 0
      %v469 = vsel %vm374, %v372, 0
      %471 = vmatprep.subr.mxu0 0.0
      %472 = vmatpush1.msra.mxu0 %v373
      %473 = vmatprep.subr.mxu0 0.0
      %474 = vmatpush1.msra.mxu0 0.0
      %475 = vmatprep.subr.mxu0 0.0
      %476 = vmatpush1.msra.mxu0 0.0
      %477 = vmatprep.subr.mxu0 0.0
      %478 = vmatpush1.msra.mxu0 0.0
      %479 = vmatprep.subr.mxu0 0.0
      %480 = vmatpush1.msra.mxu0 0.0
      %481 = vmatprep.subr.mxu0 0.0
      %482 = vmatpush1.msra.mxu0 0.0
      %483 = vmatprep.subr.mxu0 0.0
      %484 = vmatpush1.msra.mxu0 0.0
      %485 = vmatprep.subr.mxu0 0.0
      %486 = vmatpush1.msra.mxu0 0.0
      %487 = vmatprep.subr.mxu0 0.0
      %488 = vmatpush1.msra.mxu0 0.0
      %489 = vmatprep.subr.mxu0 0.0
      %490 = vmatpush1.msra.mxu0 0.0
      %491 = vmatprep.subr.mxu0 0.0
      %492 = vmatpush1.msra.mxu0 0.0
      %493 = vmatprep.subr.mxu0 0.0
      %494 = vmatpush1.msra.mxu0 0.0
      %495 = vmatprep.subr.mxu0 0.0
      %496 = vmatpush1.msra.mxu0 0.0
      %497 = vmatprep.subr.mxu0 0.0
      %498 = vmatpush1.msra.mxu0 0.0
      %499 = vmatprep.subr.mxu0 0.0
      %500 = vmatpush1.msra.mxu0 0.0
      %501 = vmatprep.subr.mxu0 0.0
      %502 = vmatpush1.msra.mxu0 0.0
      %503 = vmatprep.subr.mxu0 0.0
      %504 = vmatpush1.msra.mxu0 0.0
      %505 = vmatprep.subr.mxu0 0.0
      %506 = vmatpush1.msra.mxu0 0.0
      %507 = vmatprep.subr.mxu0 0.0
      %508 = vmatpush1.msra.mxu0 0.0
      %509 = vmatprep.subr.mxu0 0.0
      %510 = vmatpush1.msra.mxu0 0.0
      %511 = vmatprep.subr.mxu0 0.0
      %512 = vmatpush1.msra.mxu0 0.0
      %513 = vmatprep.subr.mxu0 0.0
      %514 = vmatpush1.msra.mxu0 0.0
      %515 = vmatprep.subr.mxu0 0.0
      %516 = vmatpush1.msra.mxu0 0.0
      %517 = vmatprep.subr.mxu0 0.0
      %518 = vmatpush1.msra.mxu0 0.0
      %519 = vmatprep.subr.mxu0 0.0
      %520 = vmatpush1.msra.mxu0 0.0
      %521 = vmatprep.subr.mxu0 0.0
      %522 = vmatpush1.msra.mxu0 0.0
      %523 = vmatprep.subr.mxu0 0.0
      %524 = vmatpush1.msra.mxu0 0.0
      %525 = vmatprep.subr.mxu0 0.0
      %526 = vmatpush1.msra.mxu0 0.0
      %527 = vmatprep.subr.mxu0 0.0
      %528 = vmatpush1.msra.mxu0 0.0
      %529 = vmatprep.subr.mxu0 0.0
      %530 = vmatpush1.msra.mxu0 0.0
      %531 = vmatprep.subr.mxu0 0.0
      %532 = vmatpush1.msra.mxu0 0.0
      %533 = vmatprep.subr.mxu0 0.0
      %534 = vmatpush1.msra.mxu0 0.0
      %535 = vmatprep.mubr.f32.mxu0 0.0
      %536 = vmatmul.mubr.f32.gmra.mrb[0].mxu0 %v376
      %v537 = vpop.f32.mrb[0].mxu0
      %v538 = vadd.f32 0.0, %v537
      %v539 = vpop.f32.mrb[0].mxu0
      %540 = vmatprep.mubr.f32.mxu0 0.0
      %541 = vmatmul.mubr.f32.gmra.mrb[0].mxu0 %v379
      %v542 = vpop.f32.mrb[0].mxu0
      %v543 = vadd.f32 0.0, %v542
      %v544 = vpop.f32.mrb[0].mxu0
      %545 = vmatprep.mubr.f32.mxu0 0.0
      %546 = vmatmul.mubr.f32.gmra.mrb[0].mxu0 %v382
      %v547 = vpop.f32.mrb[0].mxu0
      %v548 = vadd.f32 0.0, %v547
      %v549 = vpop.f32.mrb[0].mxu0
      %550 = vmatprep.mubr.f32.mxu0 0.0
      %551 = vmatmul.mubr.f32.gmra.mrb[0].mxu0 %v385
      %v552 = vpop.f32.mrb[0].mxu0
      %v553 = vadd.f32 0.0, %v552
      %v554 = vpop.f32.mrb[0].mxu0
      %555 = vmatprep.mubr.f32.mxu0 0.0
      %556 = vmatmul.mubr.f32.gmra.mrb[0].mxu0 %v388
      %v557 = vpop.f32.mrb[0].mxu0
      %v558 = vadd.f32 0.0, %v557
      %v559 = vpop.f32.mrb[0].mxu0
      %560 = vmatprep.mubr.f32.mxu0 0.0
      %561 = vmatmul.mubr.f32.gmra.mrb[0].mxu0 %v391
      %v562 = vpop.f32.mrb[0].mxu0
      %v563 = vadd.f32 0.0, %v562
      %v564 = vpop.f32.mrb[0].mxu0
      %565 = vmatprep.mubr.f32.mxu0 0.0
      %566 = vmatmul.mubr.f32.gmra.mrb[0].mxu0 %v394
      %v567 = vpop.f32.mrb[0].mxu0
      %v568 = vadd.f32 0.0, %v567
      %v569 = vpop.f32.mrb[0].mxu0
      %570 = vmatprep.mubr.f32.mxu0 0.0
      %571 = vmatmul.mubr.f32.gmra.mrb[0].mxu0 %v397
      %v572 = vpop.f32.mrb[0].mxu0
      %v573 = vadd.f32 0.0, %v572
      %v574 = vpop.f32.mrb[0].mxu0
      %575 = vmatprep.mubr.f32.mxu0 0.0
      %576 = vmatmul.mubr.f32.gmra.mrb[0].mxu0 %v400
      %v577 = vpop.f32.mrb[0].mxu0
      %v578 = vadd.f32 0.0, %v577
      %v579 = vpop.f32.mrb[0].mxu0
      %580 = vmatprep.mubr.f32.mxu0 0.0
      %581 = vmatmul.mubr.f32.gmra.mrb[0].mxu0 %v403
      %v582 = vpop.f32.mrb[0].mxu0
      %v583 = vadd.f32 0.0, %v582
      %v584 = vpop.f32.mrb[0].mxu0
      %585 = vmatprep.mubr.f32.mxu0 0.0
      %586 = vmatmul.mubr.f32.gmra.mrb[0].mxu0 %v406
      %v587 = vpop.f32.mrb[0].mxu0
      %v588 = vadd.f32 0.0, %v587
      %v589 = vpop.f32.mrb[0].mxu0
      %590 = vmatprep.mubr.f32.mxu0 0.0
      %591 = vmatmul.mubr.f32.gmra.mrb[0].mxu0 %v409
      %v592 = vpop.f32.mrb[0].mxu0
      %v593 = vadd.f32 0.0, %v592
      %v594 = vpop.f32.mrb[0].mxu0
      %595 = vmatprep.mubr.f32.mxu0 0.0
      %596 = vmatmul.mubr.f32.gmra.mrb[0].mxu0 %v412
      %v597 = vpop.f32.mrb[0].mxu0
      %v598 = vadd.f32 0.0, %v597
      %v599 = vpop.f32.mrb[0].mxu0
      %600 = vmatprep.mubr.f32.mxu0 0.0
      %601 = vmatmul.mubr.f32.gmra.mrb[0].mxu0 %v415
      %v602 = vpop.f32.mrb[0].mxu0
      %v603 = vadd.f32 0.0, %v602
      %v604 = vpop.f32.mrb[0].mxu0
      %605 = vmatprep.mubr.f32.mxu0 0.0
      %606 = vmatmul.mubr.f32.gmra.mrb[0].mxu0 %v418
      %v607 = vpop.f32.mrb[0].mxu0
      %v608 = vadd.f32 0.0, %v607
      %v609 = vpop.f32.mrb[0].mxu0
      %610 = vmatprep.mubr.f32.mxu0 0.0
      %611 = vmatmul.mubr.f32.gmra.mrb[0].mxu0 %v421
      %v612 = vpop.f32.mrb[0].mxu0
      %v613 = vadd.f32 0.0, %v612
      %v614 = vpop.f32.mrb[0].mxu0
      %615 = vmatprep.mubr.f32.mxu0 0.0
      %616 = vmatmul.mubr.f32.gmra.mrb[0].mxu0 %v424
      %v617 = vpop.f32.mrb[0].mxu0
      %v618 = vadd.f32 0.0, %v617
      %v619 = vpop.f32.mrb[0].mxu0
      %620 = vmatprep.mubr.f32.mxu0 0.0
      %621 = vmatmul.mubr.f32.gmra.mrb[0].mxu0 %v427
      %v622 = vpop.f32.mrb[0].mxu0
      %v623 = vadd.f32 0.0, %v622
      %v624 = vpop.f32.mrb[0].mxu0
      %625 = vmatprep.mubr.f32.mxu0 0.0
      %626 = vmatmul.mubr.f32.gmra.mrb[0].mxu0 %v430
      %v627 = vpop.f32.mrb[0].mxu0
      %v628 = vadd.f32 0.0, %v627
      %v629 = vpop.f32.mrb[0].mxu0
      %630 = vmatprep.mubr.f32.mxu0 0.0
      %631 = vmatmul.mubr.f32.gmra.mrb[0].mxu0 %v433
      %v632 = vpop.f32.mrb[0].mxu0
      %v633 = vadd.f32 0.0, %v632
      %v634 = vpop.f32.mrb[0].mxu0
      %635 = vmatprep.mubr.f32.mxu0 0.0
      %636 = vmatmul.mubr.f32.gmra.mrb[0].mxu0 %v436
      %v637 = vpop.f32.mrb[0].mxu0
      %v638 = vadd.f32 0.0, %v637
      %v639 = vpop.f32.mrb[0].mxu0
      %640 = vmatprep.mubr.f32.mxu0 0.0
      %641 = vmatmul.mubr.f32.gmra.mrb[0].mxu0 %v439
      %v642 = vpop.f32.mrb[0].mxu0
      %v643 = vadd.f32 0.0, %v642
      %v644 = vpop.f32.mrb[0].mxu0
      %645 = vmatprep.mubr.f32.mxu0 0.0
      %646 = vmatmul.mubr.f32.gmra.mrb[0].mxu0 %v442
      %v647 = vpop.f32.mrb[0].mxu0
      %v648 = vadd.f32 0.0, %v647
      %v649 = vpop.f32.mrb[0].mxu0
      %650 = vmatprep.mubr.f32.mxu0 0.0
      %651 = vmatmul.mubr.f32.gmra.mrb[0].mxu0 %v445
      %v652 = vpop.f32.mrb[0].mxu0
      %v653 = vadd.f32 0.0, %v652
      %v654 = vpop.f32.mrb[0].mxu0
      %655 = vmatprep.mubr.f32.mxu0 0.0
      %656 = vmatmul.mubr.f32.gmra.mrb[0].mxu0 %v448
      %v657 = vpop.f32.mrb[0].mxu0
      %v658 = vadd.f32 0.0, %v657
      %v659 = vpop.f32.mrb[0].mxu0
      %660 = vmatprep.mubr.f32.mxu0 0.0
      %661 = vmatmul.mubr.f32.gmra.mrb[0].mxu0 %v451
      %v662 = vpop.f32.mrb[0].mxu0
      %v663 = vadd.f32 0.0, %v662
      %v664 = vpop.f32.mrb[0].mxu0
      %665 = vmatprep.mubr.f32.mxu0 0.0
      %666 = vmatmul.mubr.f32.gmra.mrb[0].mxu0 %v454
      %v667 = vpop.f32.mrb[0].mxu0
      %v668 = vadd.f32 0.0, %v667
      %v669 = vpop.f32.mrb[0].mxu0
      %670 = vmatprep.mubr.f32.mxu0 0.0
      %671 = vmatmul.mubr.f32.gmra.mrb[0].mxu0 %v457
      %v672 = vpop.f32.mrb[0].mxu0
      %v673 = vadd.f32 0.0, %v672
      %v674 = vpop.f32.mrb[0].mxu0
      %675 = vmatprep.mubr.f32.mxu0 0.0
      %676 = vmatmul.mubr.f32.gmra.mrb[0].mxu0 %v460
      %v677 = vpop.f32.mrb[0].mxu0
      %v678 = vadd.f32 0.0, %v677
      %v679 = vpop.f32.mrb[0].mxu0
      %680 = vmatprep.mubr.f32.mxu0 0.0
      %681 = vmatmul.mubr.f32.gmra.mrb[0].mxu0 %v463
      %v682 = vpop.f32.mrb[0].mxu0
      %v683 = vadd.f32 0.0, %v682
      %v684 = vpop.f32.mrb[0].mxu0
      %685 = vmatprep.mubr.f32.mxu0 0.0
      %686 = vmatmul.mubr.f32.gmra.mrb[0].mxu0 %v466
      %v687 = vpop.f32.mrb[0].mxu0
      %v688 = vadd.f32 0.0, %v687
      %v689 = vpop.f32.mrb[0].mxu0
      %690 = vmatprep.mubr.f32.mxu0 0.0
      %691 = vmatmul.mubr.f32.gmra.mrb[0].mxu0 %v469
      %v692 = vpop.f32.mrb[0].mxu0
      %v693 = vadd.f32 0.0, %v692
      %v694 = vpop.f32.mrb[0].mxu0
      %695 = vdwg.mxu0
      %vm696 = vcmask 162816
      %697 = vst.msk [vmem:[%s145] sm:$0xff] %vm696, %v538
      %698 = vst.msk [vmem:[%s145 + $0x8] sm:$0xff] %vm696, %v543
      %699 = vst.msk [vmem:[%s145 + $0x10] sm:$0xff] %vm696, %v548
      %700 = vst.msk [vmem:[%s145 + $0x18] sm:$0xff] %vm696, %v553
      %701 = vst.msk [vmem:[%s145 + $0x20] sm:$0xff] %vm696, %v558
      %702 = vst.msk [vmem:[%s145 + $0x28] sm:$0xff] %vm696, %v563
      %703 = vst.msk [vmem:[%s145 + $0x30] sm:$0xff] %vm696, %v568
      %704 = vst.msk [vmem:[%s145 + $0x38] sm:$0xff] %vm696, %v573
      %705 = vst.msk [vmem:[%s145 + $0x40] sm:$0xff] %vm696, %v578
      %706 = vst.msk [vmem:[%s145 + $0x48] sm:$0xff] %vm696, %v583
      %707 = vst.msk [vmem:[%s145 + $0x50] sm:$0xff] %vm696, %v588
      %708 = vst.msk [vmem:[%s145 + $0x58] sm:$0xff] %vm696, %v593
      %709 = vst.msk [vmem:[%s145 + $0x60] sm:$0xff] %vm696, %v598
      %710 = vst.msk [vmem:[%s145 + $0x68] sm:$0xff] %vm696, %v603
      %711 = vst.msk [vmem:[%s145 + $0x70] sm:$0xff] %vm696, %v608
      %712 = vst.msk [vmem:[%s145 + $0x78] sm:$0xff] %vm696, %v613
      %713 = vst.msk [vmem:[%s145 + $0x80] sm:$0xff] %vm696, %v618
      %714 = vst.msk [vmem:[%s145 + $0x88] sm:$0xff] %vm696, %v623
      %715 = vst.msk [vmem:[%s145 + $0x90] sm:$0xff] %vm696, %v628
      %716 = vst.msk [vmem:[%s145 + $0x98] sm:$0xff] %vm696, %v633
      %717 = vst.msk [vmem:[%s145 + $0xa0] sm:$0xff] %vm696, %v638
      %718 = vst.msk [vmem:[%s145 + $0xa8] sm:$0xff] %vm696, %v643
      %719 = vst.msk [vmem:[%s145 + $0xb0] sm:$0xff] %vm696, %v648
      %720 = vst.msk [vmem:[%s145 + $0xb8] sm:$0xff] %vm696, %v653
      %721 = vst.msk [vmem:[%s145 + $0xc0] sm:$0xff] %vm696, %v658
      %722 = vst.msk [vmem:[%s145 + $0xc8] sm:$0xff] %vm696, %v663
      %723 = vst.msk [vmem:[%s145 + $0xd0] sm:$0xff] %vm696, %v668
      %724 = vst.msk [vmem:[%s145 + $0xd8] sm:$0xff] %vm696, %v673
      %725 = vst.msk [vmem:[%s145 + $0xe0] sm:$0xff] %vm696, %v678
      %726 = vst.msk [vmem:[%s145 + $0xe8] sm:$0xff] %vm696, %v683
      %727 = vst.msk [vmem:[%s145 + $0xf0] sm:$0xff] %vm696, %v688
      %728 = vst.msk [vmem:[%s145 + $0xf8] sm:$0xff] %vm696, %v693
      %s729 = smul.u32 32, %s13
      %p730 = scmp.lt.s32.totalorder %s729, 63
      %s731 = scalar_select %p730, %s729, 63
      %s732 = smul.addr %s731, 8
      %s733 = scalar_lea.vmem %s2, %s732
      // Predicated region
      $region29: #{tpu_custom_call.1} parent=27 // pred_check
        %p734 = pneg %p78
      $region30: #{tpu_custom_call.1} parent=27 // pred_check_branch
        %736 = sbr.rel (%p734) target = $region32
      $region31: #{tpu_custom_call.1} parent=27 // pred_region
        %s737 = smul.u32 32, %s13
      $region32: #{tpu_custom_call.1} parent=27 // pred_fallthru
        _
    $region28: #{tpu_custom_call.1} parent=5 // pred_fallthru
      _
    %p738 = scmp.le.s32.totalorder 2, %s8
    // Predicated region
    $region33: #{tpu_custom_call.1} parent=5 // pred_check
      %p739 = pneg %p738
    $region34: #{tpu_custom_call.1} parent=5 // pred_check_branch
      %741 = sbr.rel (%p739) target = $region36
    $region35: #{tpu_custom_call.1} parent=5 // pred_region
      %s742 = ssub.s32 %s8, 2
      // Predicated region
      $region37: #{tpu_custom_call.1} parent=35 // pred_check
        %p743 = pneg %p84
      $region38: #{tpu_custom_call.1} parent=35 // pred_check_branch
        %745 = sbr.rel (%p743) target = $region40
      $region39: #{tpu_custom_call.1} parent=35 // pred_region
        %s746 = smul.u32 32, %s14
        %p747 = scmp.lt.s32.totalorder %s746, 63
        %s748 = scalar_select %p747, %s746, 63
        %s749 = smul.addr %s748, 8
        %s750 = scalar_lea.vmem %s2, %s749
      $region40: #{tpu_custom_call.1} parent=35 // pred_fallthru
        _
    $region36: #{tpu_custom_call.1} parent=5 // pred_fallthru
      _
  $region6: #{tpu_custom_call.1} parent=0 // loop_footer
    %s12 = sadd.s32 1, %s8
  $region7: #{tpu_custom_call.1} parent=0 // loop_footer_branch
    %7 = sbr.rel target = $region3
  $region8: #{tpu_custom_call.1} parent=0 // loop_exit
    _

</llo_original>
